<compile_context>
chip_gen: v7x
topology: tpu7x:2x2x1
jax: 0.10.0
libtpu: 0.0.40
codegen_flags: <defaults>
</compile_context>

<pallas_src>
import functools
import numpy as np
import jax
import jax.numpy as jnp
from jax import lax
from jax.experimental import pallas as pl
from jax.experimental.pallas import tpu as pltpu

_KA = 8  # augmented contraction dim: [x0,x1,x2, 1, -|x|^2/(2var), 0,0,0]


def _round_up(a, b):
    return -(-a // b) * b


def _cdiv(a, b):
    return -(-a // b)


# --------------------------------------------------------------------------- #
# Kernel
# --------------------------------------------------------------------------- #
def gmm_kernel(xt_ref, mt_ref, oh_ref, out_ref):
    # xt_ref:  (8, tb)   augmented points, batch on the lane axis (lane-dense)
    # mt_ref:  (8, tn)   augmented means^T tile: rows [mu/var ; -|mu|^2/2var ; 1 ; 0..]
    # oh_ref:  (tn, Gp)  one-hot group matrix tile, pre-scaled by norm_const * w_n
    # out_ref: (tb, Gp)  resident across the n axis -> accumulator
    n = pl.program_id(1)

    @pl.when(n == 0)
    def _init():
        out_ref[...] = jnp.zeros_like(out_ref)

    # -dist^2/(2 var) via a single augmented MXU matmul (contract the sublane axis).
    logits = lax.dot_general(
        xt_ref[...], mt_ref[...],
        dimension_numbers=(((0,), (0,)), ((), ())),
        preferred_element_type=jnp.float32)                       # MXU: (tb, tn)
    pdf = jnp.exp(logits).astype(oh_ref.dtype)                    # EUP (free slot)
    out_ref[...] += jnp.dot(pdf, oh_ref[...],
                            preferred_element_type=jnp.float32)   # MXU: (tb, Gp)


# --------------------------------------------------------------------------- #
# Parameter-only precompute (once per model, reused across forward calls)
# --------------------------------------------------------------------------- #
def precompute_gmm_operands(mean_positions, weights, gaussian_indices,
                            num_groups, variance, *, tn=512,
                            grouping_dtype=jnp.float32):
    mu = jnp.asarray(mean_positions, jnp.float32)
    w = jnp.asarray(weights, jnp.float32)
    gi = jnp.asarray(gaussian_indices, jnp.int32)
    N, K = mu.shape

    variance = float(variance)
    std = float(np.sqrt(variance))
    inv_two_var = 1.0 / (2.0 * variance)
    norm_const = 1.0 / (((2.0 * np.pi) ** 1.5) * std ** 3)

    # Gaussian-axis tiling: tn_eff multiple of 128, Np multiple of tn_eff.
    np_min = _round_up(max(N, 1), 128)
    tn_eff = min(max(128, (int(tn) // 128) * 128), np_min)
    Np = _round_up(np_min, tn_eff)
    n_tiles = Np // tn_eff
    Gp = _round_up(max(int(num_groups), 1), 128)   # lane-dense output groups

    # Augmented means^T: x_aug^T @ mt_aug = -(|x|^2 + |mu|^2 - 2 x.mu) / (2 var)
    m2 = jnp.sum(mu * mu, axis=-1)
    mt_aug = jnp.zeros((_KA, Np), jnp.float32)
    mt_aug = mt_aug.at[:K, :N].set((mu / variance).T)
    mt_aug = mt_aug.at[K, :N].set(-inv_two_var * m2)
    mt_aug = mt_aug.at[K + 1, :N].set(1.0)

    # Group index_add as a matmul; fold norm_const * weights into it.
    oh = (gi[:, None] == jnp.arange(int(num_groups), dtype=jnp.int32)[None, :]
          ).astype(jnp.float32) * (norm_const * w)[:, None]
    oh_p = (jnp.zeros((Np, Gp), jnp.float32)
            .at[:N, :int(num_groups)].set(oh).astype(grouping_dtype))

    return dict(mt_aug=mt_aug, oh_p=oh_p, Np=Np, tn_eff=tn_eff, n_tiles=n_tiles,
                Gp=Gp, num_groups=int(num_groups), K=int(K),
                inv_two_var=inv_two_var)


# --------------------------------------------------------------------------- #
# Batch tiling: batch sits on the lane axis of x_aug, so multi-tile blocks must
# be lane-aligned (multiples of 128).  Small batches use one full-extent tile;
# larger ones pick the 128-multiple tile minimizing padding, preferring >= 2
# grid steps so v7x megacore can shard the parallel axis across both TCs.
# --------------------------------------------------------------------------- #
def _pick_batch_tiling(B, tb_max):
    if B <= 128:
        tb_eff = _round_up(B, 8)
        return tb_eff, 1, tb_eff
    tb_max = max(128, (int(tb_max) // 128) * 128)
    cands = range(128, tb_max + 1, 128)

    def key(t):
        nt = _cdiv(B, t)
        # minimize padded total, prefer >= 2 tiles (megacore), then larger tile
        return (nt * t, 0 if nt >= 2 else 1, -t)

    tb_eff = min(cands, key=key)
    num_tiles = _cdiv(B, tb_eff)
    return tb_eff, num_tiles, num_tiles * tb_eff


def _maybe_single_buffered(shape, index_map, single):
    if single:
        try:
            return pl.BlockSpec(shape, index_map, pipeline_mode=pl.Buffered(1))
        except TypeError:
            pass
    return pl.BlockSpec(shape, index_map)


# --------------------------------------------------------------------------- #
# Forward
# --------------------------------------------------------------------------- #
def gmm_batch_forward(x, operands, *, tb=512):
    """x: (B, 3) float32; operands: from precompute_gmm_operands.
    Returns (B, num_groups) float32."""
    x = jnp.asarray(x, jnp.float32)
    B, K = x.shape

    mt_aug, oh_p = operands["mt_aug"], operands["oh_p"]
    tn_eff, n_tiles = operands["tn_eff"], operands["n_tiles"]
    Gp, num_groups = operands["Gp"], operands["num_groups"]
    inv_two_var = operands["inv_two_var"]

    tb_eff, num_tiles, Bp = _pick_batch_tiling(B, tb)

    # Augmented x, transposed (8, Bp): lane-dense tiles, efficient DMA rows.
    x2 = jnp.sum(x * x, axis=-1)
    x_aug = jnp.zeros((_KA, Bp), jnp.float32)
    x_aug = x_aug.at[:K, :B].set(x.T)
    x_aug = x_aug.at[K, :B].set(1.0)
    x_aug = x_aug.at[K + 1, :B].set(-inv_two_var * x2)
    if Bp > B:
        # padded batch columns: exp(logits) -> 0 instead of garbage
        x_aug = x_aug.at[K + 1, B:].set(-1e30)

    const_ops = (n_tiles == 1)  # mt/oh fully grid-invariant -> single buffer

    # VMEM budget: streamed x/out (double buffered), mt/oh (1 or 2 buffers),
    # plus the materialized (tb, tn) logits/pdf intermediates and headroom.
    f32 = 4
    oh_b = oh_p.dtype.itemsize
    bufs_const = 1 if const_ops else 2
    vmem_needed = (2 * _KA * tb_eff * f32
                   + bufs_const * _KA * tn_eff * f32
                   + bufs_const * tn_eff * Gp * oh_b
                   + 2 * tb_eff * Gp * f32
                   + 2 * tb_eff * tn_eff * f32
                   + (2 << 20))
    try:
        vmem_cap = int(pltpu.get_tpu_info().vmem_capacity_bytes)
    except Exception:
        vmem_cap = 64 << 20  # conservative (v7x per-TC physical VMEM)
    vmem_limit = int(min(max(vmem_needed, 4 << 20), vmem_cap - (4 << 20)))

    out = pl.pallas_call(
        gmm_kernel,
        out_shape=jax.ShapeDtypeStruct((Bp, Gp), jnp.float32),
        grid_spec=pltpu.PrefetchScalarGridSpec(
            num_scalar_prefetch=0,
            grid=(num_tiles, n_tiles),          # reduction (gaussian) axis last
            in_specs=[
                pl.BlockSpec((_KA, tb_eff), lambda i, n: (0, i)),             # x tile (streamed)
                _maybe_single_buffered((_KA, tn_eff), lambda i, n: (0, n),
                                       const_ops),                            # means^T tile
                _maybe_single_buffered((tn_eff, Gp), lambda i, n: (n, 0),
                                       const_ops),                            # scaled one-hot tile
            ],
            out_specs=pl.BlockSpec((tb_eff, Gp), lambda i, n: (i, 0)),         # resident accumulator
        ),
        compiler_params=pltpu.CompilerParams(
            dimension_semantics=("parallel", "arbitrary"),
            vmem_limit_bytes=vmem_limit,
        ),
    )(x_aug, mt_aug, oh_p)

    return out[:B, :num_groups]


# --------------------------------------------------------------------------- #
# Pure-JAX reference (float32 transcription of the PyTorch forward)
# --------------------------------------------------------------------------- #
def gmm_reference(x, mean_positions, weights, gaussian_indices, num_groups, variance):
    std = np.sqrt(variance)
    d2 = jnp.sum((x[:, None, :] - mean_positions[None, :, :]) ** 2, axis=2)
    pdf = jnp.exp(-d2 / (2.0 * std ** 2)) / (((2.0 * np.pi) ** 1.5) * std ** 3)
    pdf = pdf * weights[None, :]
    add_to = jnp.zeros((x.shape[0], num_groups), jnp.float32)
    return add_to.at[:, gaussian_indices].add(pdf)  # torch.index_add along dim 1


if __name__ == "__main__":
    key = jax.random.PRNGKey(0)
    k_means, k_x = jax.random.split(key)

    # Module config (synthetic, deterministic, small)
    N_list = [5, 3]                       # two GMM groups
    total_N = sum(N_list)                 # 8 gaussians
    num_groups = len(N_list)              # 2
    variance = 0.5
    B = 16                                # batch of 3-D points

    mean_positions = jax.random.normal(k_means, (total_N, 3), dtype=jnp.float32)
    weights = jnp.full((total_N,), 1.0 / 5.679043443503446, dtype=jnp.float32)
    gaussian_indices = jnp.asarray(
        np.concatenate([[i] * n for i, n in enumerate(N_list)]), dtype=jnp.int32)

    x = jax.random.normal(k_x, (B, 3), dtype=jnp.float32)

    # Parameter-only operands: built once per model, reused every forward call.
    operands = precompute_gmm_operands(mean_positions, weights, gaussian_indices,
                                       num_groups, variance, tn=512)

    out = gmm_batch_forward(x, operands, tb=512)
    out = jax.block_until_ready(out)

    ref = gmm_reference(x, mean_positions, weights, gaussian_indices,
                        num_groups, variance)
    ref = jax.block_until_ready(ref)

    assert out.shape == (B, num_groups)
    np.testing.assert_allclose(np.asarray(out), np.asarray(ref),
                               rtol=1e-4, atol=1e-6)
    print("KERNEL_OK")
</pallas_src>

<mosaic_0001>
module attributes {stable_mosaic.version = 11 : i64} {
  func.func @gmm_kernel(%arg0: i32, %arg1: i32, %arg2: memref<8x16xf32, #tpu.memory_space<vmem>>, %arg3: memref<8x128xf32, #tpu.memory_space<vmem>>, %arg4: memref<128x128xf32, #tpu.memory_space<vmem>>, %arg5: memref<16x128xf32, #tpu.memory_space<vmem>>) attributes {dimension_semantics = [#tpu.dimension_semantics<parallel>, #tpu.dimension_semantics<arbitrary>], iteration_bounds = array<i64: 1, 1>, scalar_prefetch = 0 : i64, scratch_operands = 0 : i64, tpu.core_type = #tpu.core_type<tc>, window_params = [{transform_indices = @transform_0, window_bounds = array<i64: 8, 16>}, {pipeline_mode = #tpu.pipeline_mode<synchronous>, transform_indices = @transform_1, window_bounds = array<i64: 8, 128>}, {pipeline_mode = #tpu.pipeline_mode<synchronous>, transform_indices = @transform_2, window_bounds = array<i64: 128, 128>}, {transform_indices = @transform_3, window_bounds = array<i64: 16, 128>}]} {
    %c0_i32 = arith.constant 0 : i32
    %0 = arith.cmpi eq, %arg1, %c0_i32 : i32
    %1 = arith.extui %0 : i1 to i32
    %c0_i32_0 = arith.constant 0 : i32
    %2 = arith.cmpi ne, %1, %c0_i32_0 : i32
    scf.if %2 {
      %cst_11 = arith.constant 0.000000e+00 : f32
      %12 = vector.broadcast %cst_11 : f32 to vector<16x128xf32>
      %c0_12 = arith.constant 0 : index
      %c0_13 = arith.constant 0 : index
      %13 = vector.load %arg5[%c0_12, %c0_13] : memref<16x128xf32, #tpu.memory_space<vmem>>, vector<16x128xf32>
      tpu.vector_store %arg5[%c0_12, %c0_13], %12 {strides = array<i32>} : memref<16x128xf32, #tpu.memory_space<vmem>>, vector<16x128xf32>,
    } else {
    }
    %c0 = arith.constant 0 : index
    %c0_1 = arith.constant 0 : index
    %3 = vector.load %arg2[%c0, %c0_1] : memref<8x16xf32, #tpu.memory_space<vmem>>, vector<8x16xf32>
    %c0_2 = arith.constant 0 : index
    %c0_3 = arith.constant 0 : index
    %4 = vector.load %arg3[%c0_2, %c0_3] : memref<8x128xf32, #tpu.memory_space<vmem>>, vector<8x128xf32>
    %cst = arith.constant dense<0.000000e+00> : vector<16x128xf32>
    %5 = tpu.matmul %3, %4, %cst {dimension_numbers = #tpu.dot_dimension_numbers<[0], [0], [1], [1], [0, 1, 1, 1], [], []>} : vector<8x16xf32>, vector<8x128xf32>, vector<16x128xf32> -> vector<16x128xf32>
    %6 = math.exp %5 : vector<16x128xf32>
    %c0_4 = arith.constant 0 : index
    %c0_5 = arith.constant 0 : index
    %7 = vector.load %arg5[%c0_4, %c0_5] : memref<16x128xf32, #tpu.memory_space<vmem>>, vector<16x128xf32>
    %c0_6 = arith.constant 0 : index
    %c0_7 = arith.constant 0 : index
    %8 = vector.load %arg4[%c0_6, %c0_7] : memref<128x128xf32, #tpu.memory_space<vmem>>, vector<128x128xf32>
    %cst_8 = arith.constant dense<0.000000e+00> : vector<16x128xf32>
    %9 = tpu.matmul %6, %8, %cst_8 {dimension_numbers = #tpu.dot_dimension_numbers<[1], [0], [0], [1], [0, 0, 1, 1], [], []>} : vector<16x128xf32>, vector<128x128xf32>, vector<16x128xf32> -> vector<16x128xf32>
    %10 = arith.addf %7, %9 : vector<16x128xf32>
    %c0_9 = arith.constant 0 : index
    %c0_10 = arith.constant 0 : index
    %11 = vector.load %arg5[%c0_9, %c0_10] : memref<16x128xf32, #tpu.memory_space<vmem>>, vector<16x128xf32>
    tpu.vector_store %arg5[%c0_9, %c0_10], %10 {strides = array<i32>} : memref<16x128xf32, #tpu.memory_space<vmem>>, vector<16x128xf32>,
    return
  }
  func.func @transform_0(%arg0: i32, %arg1: i32) -> (i32, i32) {
    %c0_i32 = arith.constant 0 : i32
    %c0_i32_0 = arith.constant 0 : i32
    return %c0_i32, %arg0 : i32, i32
  }
  func.func @transform_1(%arg0: i32, %arg1: i32) -> (i32, i32) {
    %c0_i32 = arith.constant 0 : i32
    %c0_i32_0 = arith.constant 0 : i32
    return %c0_i32, %arg1 : i32, i32
  }
  func.func @transform_2(%arg0: i32, %arg1: i32) -> (i32, i32) {
    %c0_i32 = arith.constant 0 : i32
    %c0_i32_0 = arith.constant 0 : i32
    return %arg1, %c0_i32 : i32, i32
  }
  func.func @transform_3(%arg0: i32, %arg1: i32) -> (i32, i32) {
    %c0_i32 = arith.constant 0 : i32
    %c0_i32_0 = arith.constant 0 : i32
    return %arg0, %c0_i32 : i32, i32
  }
}

</mosaic_0001>

<llo_original>
// kernel: tpu_custom_call.1
$region0: #{tpu_custom_call.1}
  #allocation0 [shape = 'u32[]', space=smem, size = 0x4, offset = 0x4, fixed_abs, tag = 'smem constant byte address 0x4 - core index']
  #allocation1 [shape = 'u32[144,128]{1,0:T(1,128)}', space=vmem, size = 0x12000, scoped, tag = 'internal scratch']
  %s0 = inlined_call_operand.hbm [shape: f32[8,16], index: 0, kind: input, shape index: {}]
  %s1 = inlined_call_operand.hbm [shape: f32[8,128], index: 1, kind: input, shape index: {}]
  %s2 = inlined_call_operand.hbm [shape: f32[128,128], index: 2, kind: input, shape index: {}]
  %s3 = inlined_call_operand.hbm [shape: f32[16,128], index: 3, kind: output, shape index: {}]
  %s4 = sld [smem:[#allocation0]]
  $region38: #{tpu_custom_call.1} parent=0
    _
  %s6 = ssub.s32 1, %s4
  %s7 = scalar_select 0, %s6, %s4
  $region1: #{tpu_custom_call.1} parent=0
    #allocation2 [shape = 'u8[4096]{0}', space=vmem, size = 0x1000, scoped, tag = 'input window, operand 0, single buffered']
    #allocation3 [shape = 's32[1]{0}', space=sflag, size = 0x4, scoped, tag = 'scoped memory for tpu_custom_call.1']
    #allocation4 [shape = 's32[1]{0}', space=sflag, size = 0x4, scoped, tag = 'scoped memory for tpu_custom_call.1']
    #allocation5 [shape = 'u8[4096]{0}', space=vmem, size = 0x1000, scoped, tag = 'input window, operand 1, single buffered']
    #allocation6 [shape = 's32[1]{0}', space=sflag, size = 0x4, scoped, tag = 'scoped memory for tpu_custom_call.1']
    #allocation7 [shape = 'u8[65536]{0}', space=vmem, size = 0x10000, scoped, tag = 'input window, operand 2, single buffered']
    #allocation8 [shape = 'u8[8192]{0}', space=vmem, size = 0x2000, scoped, tag = 'output window, operand 0, single buffered']
    %8 = vsyncpa [#allocation3], 0
    %9 = vsyncpa [#allocation6], 0
    %10 = vsyncpa [#allocation4], 0
    // Predicated region
    $region2: #{tpu_custom_call.1} parent=1 // pred_check
      _
    $region3: #{tpu_custom_call.1} parent=1 // pred_check_branch
      %12 = sbr.rel (0) target = $region5
    $region4: #{tpu_custom_call.1} parent=1 // pred_region
      %s14 = ssub.s32 128, 128
      %15 = vsyncadd [#allocation3], %s14
      %s17 = sshll.u32 [#allocation2], 4
      %s18 = int_to_ptr.vmem [resolvable:$true] %s17
      %20 = dma.hbm_to_vmem [thread:$0]  %s0, 128, %s18, [#allocation3]
    $region5: #{tpu_custom_call.1} parent=1 // pred_fallthru
      _
    // Predicated region
    $region6: #{tpu_custom_call.1} parent=1 // pred_check
      _
    $region7: #{tpu_custom_call.1} parent=1 // pred_check_branch
      %22 = sbr.rel (0) target = $region9
    $region8: #{tpu_custom_call.1} parent=1 // pred_region
      %s24 = ssub.s32 128, 128
      %25 = vsyncadd [#allocation6], %s24
      %s27 = sshll.u32 [#allocation5], 4
      %s28 = int_to_ptr.vmem [resolvable:$true] %s27
      %30 = dma.hbm_to_vmem [thread:$0]  %s1, 128, %s28, [#allocation6]
    $region9: #{tpu_custom_call.1} parent=1 // pred_fallthru
      _
    // Predicated region
    $region10: #{tpu_custom_call.1} parent=1 // pred_check
      _
    $region11: #{tpu_custom_call.1} parent=1 // pred_check_branch
      %32 = sbr.rel (0) target = $region13
    $region12: #{tpu_custom_call.1} parent=1 // pred_region
      %s34 = ssub.s32 2048, 2048
      %35 = vsyncadd [#allocation6], %s34
      %s36 = sshll.u32 [#allocation7], 4
      %s37 = int_to_ptr.vmem [resolvable:$true] %s36
      %42 = dma.hbm_to_vmem [thread:$0]  %s2, 2048, %s37, [#allocation6], 128, 128, 8
    $region13: #{tpu_custom_call.1} parent=1 // pred_fallthru
      _
    // Predicated region
    $region14: #{tpu_custom_call.1} parent=1 // pred_check
      _
    $region15: #{tpu_custom_call.1} parent=1 // pred_check_branch
      %44 = sbr.rel (0) target = $region17
    $region16: #{tpu_custom_call.1} parent=1 // pred_region
      %45 = dma.done [#allocation3], 128
    $region17: #{tpu_custom_call.1} parent=1 // pred_fallthru
      _
    // Predicated region
    $region18: #{tpu_custom_call.1} parent=1 // pred_check
      _
    $region19: #{tpu_custom_call.1} parent=1 // pred_check_branch
      %47 = sbr.rel (0) target = $region21
    $region20: #{tpu_custom_call.1} parent=1 // pred_region
      %48 = dma.done [#allocation6], 128
    $region21: #{tpu_custom_call.1} parent=1 // pred_fallthru
      _
    // Predicated region
    $region22: #{tpu_custom_call.1} parent=1 // pred_check
      _
    $region23: #{tpu_custom_call.1} parent=1 // pred_check_branch
      %50 = sbr.rel (0) target = $region25
    $region24: #{tpu_custom_call.1} parent=1 // pred_region
      %51 = dma.done [#allocation6], 2048
    $region25: #{tpu_custom_call.1} parent=1 // pred_fallthru
      _
    %p52 = scmp.eq.s32.totalorder 0, 0
    // Predicated region
    $region26: #{tpu_custom_call.1} parent=1 // pred_check
      %p53 = pneg %p52
    $region27: #{tpu_custom_call.1} parent=1 // pred_check_branch
      %55 = sbr.rel (%p53) target = $region29
    $region28: #{tpu_custom_call.1} parent=1 // pred_region
      %56 = vst [vmem:[#allocation8] sm:$0xff] 0.0
      %57 = vst [vmem:[#allocation8 + $0x8] sm:$0xff] 0.0
    $region29: #{tpu_custom_call.1} parent=1 // pred_fallthru
      _
    %v58 = vld [vmem:[#allocation2] sm:$0xff]
    %v59 = vld [vmem:[#allocation5] sm:$0xff]
    %60 = vxpose.xlu0.b32.start [1/16] %v58, 128
    %61 = vxpose.xlu0.b32.cont [2/16] 0.0, 128
    %62 = vxpose.xlu0.b32.cont [3/16] 0.0, 128
    %63 = vxpose.xlu0.b32.cont [4/16] 0.0, 128
    %64 = vxpose.xlu0.b32.cont [5/16] 0.0, 128
    %65 = vxpose.xlu0.b32.cont [6/16] 0.0, 128
    %66 = vxpose.xlu0.b32.cont [7/16] 0.0, 128
    %67 = vxpose.xlu0.b32.cont [8/16] 0.0, 128
    %68 = vxpose.xlu0.b32.cont [9/16] 0.0, 128
    %69 = vxpose.xlu0.b32.cont [10/16] 0.0, 128
    %70 = vxpose.xlu0.b32.cont [11/16] 0.0, 128
    %71 = vxpose.xlu0.b32.cont [12/16] 0.0, 128
    %72 = vxpose.xlu0.b32.cont [13/16] 0.0, 128
    %73 = vxpose.xlu0.b32.cont [14/16] 0.0, 128
    %74 = vxpose.xlu0.b32.cont [15/16] 0.0, 128
    %75 = vxpose.xlu0.b32.end [16/16] 0.0, 128
    %v76 = vpop.trf.xlu0
    %v77 = vpop.trf.xlu0
    %v78 = vpop.trf.xlu0
    %v79 = vpop.trf.xlu0
    %v80 = vpop.trf.xlu0
    %v81 = vpop.trf.xlu0
    %v82 = vpop.trf.xlu0
    %v83 = vpop.trf.xlu0
    %v84 = vpop.trf.xlu0
    %v85 = vpop.trf.xlu0
    %v86 = vpop.trf.xlu0
    %v87 = vpop.trf.xlu0
    %v88 = vpop.trf.xlu0
    %v89 = vpop.trf.xlu0
    %v90 = vpop.trf.xlu0
    %v91 = vpop.trf.xlu0
    %vm92 = vcmask 64512
    %v94 = vsel %vm92, %v76, 0
    %v97 = vsel %vm92, %v77, 0
    %99 = vmatprep.subr.mxu0 0.0
    %100 = vmatpush1.msra.mxu0 %v59
    %101 = vmatprep.subr.mxu0 0.0
    %102 = vmatpush1.msra.mxu0 0.0
    %103 = vmatprep.subr.mxu0 0.0
    %104 = vmatpush1.msra.mxu0 0.0
    %105 = vmatprep.subr.mxu0 0.0
    %106 = vmatpush1.msra.mxu0 0.0
    %107 = vmatprep.subr.mxu0 0.0
    %108 = vmatpush1.msra.mxu0 0.0
    %109 = vmatprep.subr.mxu0 0.0
    %110 = vmatpush1.msra.mxu0 0.0
    %111 = vmatprep.subr.mxu0 0.0
    %112 = vmatpush1.msra.mxu0 0.0
    %113 = vmatprep.subr.mxu0 0.0
    %114 = vmatpush1.msra.mxu0 0.0
    %115 = vmatprep.subr.mxu0 0.0
    %116 = vmatpush1.msra.mxu0 0.0
    %117 = vmatprep.subr.mxu0 0.0
    %118 = vmatpush1.msra.mxu0 0.0
    %119 = vmatprep.subr.mxu0 0.0
    %120 = vmatpush1.msra.mxu0 0.0
    %121 = vmatprep.subr.mxu0 0.0
    %122 = vmatpush1.msra.mxu0 0.0
    %123 = vmatprep.subr.mxu0 0.0
    %124 = vmatpush1.msra.mxu0 0.0
    %125 = vmatprep.subr.mxu0 0.0
    %126 = vmatpush1.msra.mxu0 0.0
    %127 = vmatprep.subr.mxu0 0.0
    %128 = vmatpush1.msra.mxu0 0.0
    %129 = vmatprep.subr.mxu0 0.0
    %130 = vmatpush1.msra.mxu0 0.0
    %131 = vmatprep.subr.mxu0 0.0
    %132 = vmatpush1.msra.mxu0 0.0
    %133 = vmatprep.subr.mxu0 0.0
    %134 = vmatpush1.msra.mxu0 0.0
    %135 = vmatprep.subr.mxu0 0.0
    %136 = vmatpush1.msra.mxu0 0.0
    %137 = vmatprep.subr.mxu0 0.0
    %138 = vmatpush1.msra.mxu0 0.0
    %139 = vmatprep.subr.mxu0 0.0
    %140 = vmatpush1.msra.mxu0 0.0
    %141 = vmatprep.subr.mxu0 0.0
    %142 = vmatpush1.msra.mxu0 0.0
    %143 = vmatprep.subr.mxu0 0.0
    %144 = vmatpush1.msra.mxu0 0.0
    %145 = vmatprep.subr.mxu0 0.0
    %146 = vmatpush1.msra.mxu0 0.0
    %147 = vmatprep.subr.mxu0 0.0
    %148 = vmatpush1.msra.mxu0 0.0
    %149 = vmatprep.subr.mxu0 0.0
    %150 = vmatpush1.msra.mxu0 0.0
    %151 = vmatprep.subr.mxu0 0.0
    %152 = vmatpush1.msra.mxu0 0.0
    %153 = vmatprep.subr.mxu0 0.0
    %154 = vmatpush1.msra.mxu0 0.0
    %155 = vmatprep.subr.mxu0 0.0
    %156 = vmatpush1.msra.mxu0 0.0
    %157 = vmatprep.subr.mxu0 0.0
    %158 = vmatpush1.msra.mxu0 0.0
    %159 = vmatprep.subr.mxu0 0.0
    %160 = vmatpush1.msra.mxu0 0.0
    %161 = vmatprep.subr.mxu0 0.0
    %162 = vmatpush1.msra.mxu0 0.0
    %163 = vmatprep.mubr.f32.mxu0 0.0
    %164 = vmatmul.mubr.f32.gmra.mrb[0].mxu0 %v94
    %v165 = vpop.f32.mrb[0].mxu0
    %v166 = vadd.f32 0.0, %v165
    %v167 = vpop.f32.mrb[0].mxu0
    %168 = vmatprep.mubr.f32.mxu0 0.0
    %169 = vmatmul.mubr.f32.gmra.mrb[0].mxu0 %v97
    %v170 = vpop.f32.mrb[0].mxu0
    %v171 = vadd.f32 0.0, %v170
    %v172 = vpop.f32.mrb[0].mxu0
    %173 = vdwg.mxu0
    %v174 = vmul.f32 %v166, 1.442695
    %v175 = vpow.pop %v174
    %v176 = vmul.f32 %v171, 1.442695
    %v177 = vpow.pop %v176
    %v178 = vld [vmem:[#allocation8] sm:$0xff]
    %v179 = vld [vmem:[#allocation8 + $0x8] sm:$0xff]
    %v180 = vld [vmem:[#allocation7] sm:$0xff]
    %v181 = vld [vmem:[#allocation7 + $0x8] sm:$0xff]
    %v182 = vld [vmem:[#allocation7 + $0x10] sm:$0xff]
    %v183 = vld [vmem:[#allocation7 + $0x18] sm:$0xff]
    %v184 = vld [vmem:[#allocation7 + $0x20] sm:$0xff]
    %v185 = vld [vmem:[#allocation7 + $0x28] sm:$0xff]
    %v186 = vld [vmem:[#allocation7 + $0x30] sm:$0xff]
    %v187 = vld [vmem:[#allocation7 + $0x38] sm:$0xff]
    %v188 = vld [vmem:[#allocation7 + $0x40] sm:$0xff]
    %v189 = vld [vmem:[#allocation7 + $0x48] sm:$0xff]
    %v190 = vld [vmem:[#allocation7 + $0x50] sm:$0xff]
    %v191 = vld [vmem:[#allocation7 + $0x58] sm:$0xff]
    %v192 = vld [vmem:[#allocation7 + $0x60] sm:$0xff]
    %v193 = vld [vmem:[#allocation7 + $0x68] sm:$0xff]
    %v194 = vld [vmem:[#allocation7 + $0x70] sm:$0xff]
    %v195 = vld [vmem:[#allocation7 + $0x78] sm:$0xff]
    %196 = vmatprep.subr.mxu0 0.0
    %197 = vmatpush1.msra.mxu0 %v180
    %198 = vmatprep.subr.mxu0 0.0
    %199 = vmatpush1.msra.mxu0 %v181
    %200 = vmatprep.subr.mxu0 0.0
    %201 = vmatpush1.msra.mxu0 %v182
    %202 = vmatprep.subr.mxu0 0.0
    %203 = vmatpush1.msra.mxu0 %v183
    %204 = vmatprep.subr.mxu0 0.0
    %205 = vmatpush1.msra.mxu0 %v184
    %206 = vmatprep.subr.mxu0 0.0
    %207 = vmatpush1.msra.mxu0 %v185
    %208 = vmatprep.subr.mxu0 0.0
    %209 = vmatpush1.msra.mxu0 %v186
    %210 = vmatprep.subr.mxu0 0.0
    %211 = vmatpush1.msra.mxu0 %v187
    %212 = vmatprep.subr.mxu0 0.0
    %213 = vmatpush1.msra.mxu0 %v188
    %214 = vmatprep.subr.mxu0 0.0
    %215 = vmatpush1.msra.mxu0 %v189
    %216 = vmatprep.subr.mxu0 0.0
    %217 = vmatpush1.msra.mxu0 %v190
    %218 = vmatprep.subr.mxu0 0.0
    %219 = vmatpush1.msra.mxu0 %v191
    %220 = vmatprep.subr.mxu0 0.0
    %221 = vmatpush1.msra.mxu0 %v192
    %222 = vmatprep.subr.mxu0 0.0
    %223 = vmatpush1.msra.mxu0 %v193
    %224 = vmatprep.subr.mxu0 0.0
    %225 = vmatpush1.msra.mxu0 %v194
    %226 = vmatprep.subr.mxu0 0.0
    %227 = vmatpush1.msra.mxu0 %v195
    %228 = vmatprep.subr.mxu0 0.0
    %229 = vmatpush1.msra.mxu0 0.0
    %230 = vmatprep.subr.mxu0 0.0
    %231 = vmatpush1.msra.mxu0 0.0
    %232 = vmatprep.subr.mxu0 0.0
    %233 = vmatpush1.msra.mxu0 0.0
    %234 = vmatprep.subr.mxu0 0.0
    %235 = vmatpush1.msra.mxu0 0.0
    %236 = vmatprep.subr.mxu0 0.0
    %237 = vmatpush1.msra.mxu0 0.0
    %238 = vmatprep.subr.mxu0 0.0
    %239 = vmatpush1.msra.mxu0 0.0
    %240 = vmatprep.subr.mxu0 0.0
    %241 = vmatpush1.msra.mxu0 0.0
    %242 = vmatprep.subr.mxu0 0.0
    %243 = vmatpush1.msra.mxu0 0.0
    %244 = vmatprep.subr.mxu0 0.0
    %245 = vmatpush1.msra.mxu0 0.0
    %246 = vmatprep.subr.mxu0 0.0
    %247 = vmatpush1.msra.mxu0 0.0
    %248 = vmatprep.subr.mxu0 0.0
    %249 = vmatpush1.msra.mxu0 0.0
    %250 = vmatprep.subr.mxu0 0.0
    %251 = vmatpush1.msra.mxu0 0.0
    %252 = vmatprep.subr.mxu0 0.0
    %253 = vmatpush1.msra.mxu0 0.0
    %254 = vmatprep.subr.mxu0 0.0
    %255 = vmatpush1.msra.mxu0 0.0
    %256 = vmatprep.subr.mxu0 0.0
    %257 = vmatpush1.msra.mxu0 0.0
    %258 = vmatprep.subr.mxu0 0.0
    %259 = vmatpush1.msra.mxu0 0.0
    %260 = vmatprep.mubr.f32.mxu0 0.0
    %261 = vmatmul.mubr.f32.gmra.mrb[0].mxu0 %v175
    %v262 = vpop.f32.mrb[0].mxu0
    %v263 = vadd.f32 0.0, %v262
    %v264 = vpop.f32.mrb[0].mxu0
    %265 = vmatprep.mubr.f32.mxu0 0.0
    %266 = vmatmul.mubr.f32.gmra.mrb[0].mxu0 %v177
    %v267 = vpop.f32.mrb[0].mxu0
    %v268 = vadd.f32 0.0, %v267
    %v269 = vpop.f32.mrb[0].mxu0
    %270 = vdwg.mxu0
    %v271 = vadd.f32 %v178, %v263
    %v272 = vadd.f32 %v179, %v268
    %273 = vst [vmem:[#allocation8] sm:$0xff] %v271
    %274 = vst [vmem:[#allocation8 + $0x8] sm:$0xff] %v272
    // Predicated region
    $region30: #{tpu_custom_call.1} parent=1 // pred_check
      _
    $region31: #{tpu_custom_call.1} parent=1 // pred_check_branch
      %276 = sbr.rel (0) target = $region33
    $region32: #{tpu_custom_call.1} parent=1 // pred_region
      %s278 = ssub.s32 256, 256
      %279 = vsyncadd [#allocation4], %s278
      %s280 = sshll.u32 [#allocation8], 4
      %s281 = int_to_ptr.vmem [resolvable:$true] %s280
      %286 = dma.vmem_to_hbm [thread:$0]  %s281, 256, %s3, [#allocation4], 128, 128, 8
    $region33: #{tpu_custom_call.1} parent=1 // pred_fallthru
      _
    // Predicated region
    $region34: #{tpu_custom_call.1} parent=1 // pred_check
      _
    $region35: #{tpu_custom_call.1} parent=1 // pred_check_branch
      %288 = sbr.rel (0) target = $region37
    $region36: #{tpu_custom_call.1} parent=1 // pred_region
      %289 = dma.done [#allocation4], 256
    $region37: #{tpu_custom_call.1} parent=1 // pred_fallthru
      _
    %290 = vsyncpa [#allocation3], 1
    %291 = vsyncpa [#allocation6], 1
    %292 = vsyncpa [#allocation4], 1

</llo_original>
